<compile_context>
chip_gen: v7x
topology: tpu7x:2x2x1
jax: 0.10.0
libtpu: 0.0.40
codegen_flags: <defaults>
</compile_context>

<pallas_src>
import jax
import jax.numpy as jnp
from jax.experimental import pallas as pl
from jax.experimental.pallas import tpu as pltpu


def _iou_partial_kernel(pred_ref, target_ref, inter_ref, psum_ref, tsum_ref):
    """pred/target: (TB, CL) block in the caller's dtype.
    Outputs: (TB, 1) f32 partial sums for this lane chunk."""
    p = pred_ref[...].astype(jnp.float32)   # no-op when inputs are already f32
    t = target_ref[...].astype(jnp.float32)
    inter_ref[...] = jnp.sum(p * t, axis=-1, keepdims=True)
    psum_ref[...] = jnp.sum(p, axis=-1, keepdims=True)
    tsum_ref[...] = jnp.sum(t, axis=-1, keepdims=True)


def _vmem_limit_bytes():
    try:
        cap = pltpu.get_tpu_info().vmem_capacity_bytes
    except Exception:
        cap = 64 << 20          # v7x per-TC VMEM, the smallest of v5e/v6e/v7x
    return int(min(cap * 3 // 4, 100 << 20))


def _choose_tiling(n, l, itemsize):
    """Returns (tb, n_batch_blocks, chunk_l, n_chunks, vmem_limit_bytes)."""
    vmem_limit = _vmem_limit_bytes()
    # Per-step VMEM ~ 2 inputs x 2 pipeline buffers x block + ~1.5 blocks of
    # f32 temporaries (the p*t product etc.)  ->  budget ~ vmem_limit / 6.
    blk_budget = max(1 << 20, min(8 << 20, vmem_limit // 6))

    # ---- spatial (lane) chunking -------------------------------------------
    # Chunks must tile l exactly (a ragged chunk would sum garbage lanes), so
    # only chunk when l is a multiple of 128 and n_chunks divides l // 128.
    n_chunks, chunk_l = 1, l
    if l % 128 == 0 and l * itemsize > blk_budget // 8:
        lanes = l // 128
        target_lanes = max(1, (blk_budget // 8) // (128 * itemsize))
        nc = pl.cdiv(lanes, target_lanes)
        while lanes % nc:
            nc += 1
        n_chunks, chunk_l = nc, (lanes // nc) * 128
    # TODO(synk): mask-based ragged chunking for huge rows with l % 128 != 0.

    # ---- batch tiling --------------------------------------------------------
    rows = max(1, blk_budget // (chunk_l * itemsize))
    if rows >= n:
        tb = n                               # full-extent batch block
    else:
        tb = max(8, (rows // 8) * 8)         # f32 sublane granule
    n_batch_blocks = pl.cdiv(n, tb)

    # ---- keep both v7x TensorCores busy: need >= 2 parallel grid steps ------
    if n_batch_blocks * n_chunks < 2:
        if n >= 16:
            tb = max(8, ((n // 2) // 8) * 8)
            n_batch_blocks = pl.cdiv(n, tb)
        elif l % 128 == 0 and (l // 128) % 2 == 0:
            n_chunks, chunk_l = 2, l // 2

    return tb, n_batch_blocks, chunk_l, n_chunks, vmem_limit


def iou_loss(pred, target):
    """Pallas implementation of IoULoss.forward (scalar output)."""
    assert pred.shape == target.shape and pred.ndim == 3
    n, h, w = pred.shape
    l = h * w

    # Free, contiguous reshape; keep the caller's dtype (no cast, no pad).
    p = pred.reshape(n, l)
    t = target.reshape(n, l)
    itemsize = p.dtype.itemsize

    tb, nb, chunk_l, nc, vmem_limit = _choose_tiling(n, l, itemsize)

    part_shape = jax.ShapeDtypeStruct((nc, n, 1), jnp.float32)
    in_spec = pl.BlockSpec((tb, chunk_l), lambda i, j: (i, j))
    out_spec = pl.BlockSpec((None, tb, 1), lambda i, j: (j, i, 0))

    inter, psum, tsum = pl.pallas_call(
        _iou_partial_kernel,
        out_shape=(part_shape, part_shape, part_shape),
        grid_spec=pltpu.PrefetchScalarGridSpec(
            num_scalar_prefetch=0,
            grid=(nb, nc),
            in_specs=[in_spec, in_spec],
            out_specs=[out_spec, out_spec, out_spec],
        ),
        compiler_params=pltpu.CompilerParams(
            dimension_semantics=("parallel", "parallel"),
            vmem_limit_bytes=vmem_limit,
        ),
    )(p, t)

    # Tiny epilogue in JAX: combine lane chunks, per-row IoU, mean over batch.
    smooth = jnp.float32(0.001)
    inter = inter.sum(axis=0)[:, 0]
    sum_p = psum.sum(axis=0)[:, 0]
    sum_t = tsum.sum(axis=0)[:, 0]
    union = sum_p + sum_t - inter
    iou = (inter + smooth) / (union + smooth)
    return jnp.mean(jnp.float32(1.0) - iou)


def _iou_loss_ref(pred, target):
    smooth = 0.001
    inter = (pred * target).sum(axis=(1, 2))
    union = (pred + target).sum(axis=(1, 2)) - inter
    iou = (inter + smooth) / (union + smooth)
    return (1.0 - iou).mean()


if __name__ == "__main__":
    key = jax.random.PRNGKey(0)
    k1, k2 = jax.random.split(key)
    N, H, W = 2, 16, 16
    # Inputs contain values of either 0 or 1, per the module docstring.
    pred = (jax.random.uniform(k1, (N, H, W)) > 0.5).astype(jnp.float32)
    target = (jax.random.uniform(k2, (N, H, W)) > 0.5).astype(jnp.float32)

    loss = iou_loss(pred, target)
    jax.block_until_ready(loss)

    ref = _iou_loss_ref(pred, target)
    assert jnp.allclose(loss, ref, atol=1e-5, rtol=1e-5), (loss, ref)

    print("KERNEL_OK")
</pallas_src>

<mosaic_0001>
module attributes {stable_mosaic.version = 11 : i64} {
  func.func @_iou_partial_kernel(%arg0: i32, %arg1: i32, %arg2: memref<2x128xf32, #tpu.memory_space<vmem>>, %arg3: memref<2x128xf32, #tpu.memory_space<vmem>>, %arg4: memref<1x2x1xf32, #tpu.memory_space<vmem>>, %arg5: memref<1x2x1xf32, #tpu.memory_space<vmem>>, %arg6: memref<1x2x1xf32, #tpu.memory_space<vmem>>) attributes {dimension_semantics = [#tpu.dimension_semantics<parallel>, #tpu.dimension_semantics<parallel>], iteration_bounds = array<i64: 1, 2>, scalar_prefetch = 0 : i64, scratch_operands = 0 : i64, tpu.core_type = #tpu.core_type<tc>, window_params = [{transform_indices = @transform_0, window_bounds = array<i64: 2, 128>}, {transform_indices = @transform_1, window_bounds = array<i64: 2, 128>}, {transform_indices = @transform_2, window_bounds = array<i64: 1, 2, 1>}, {transform_indices = @transform_3, window_bounds = array<i64: 1, 2, 1>}, {transform_indices = @transform_4, window_bounds = array<i64: 1, 2, 1>}]} {
    %c0 = arith.constant 0 : index
    %c0_0 = arith.constant 0 : index
    %0 = vector.load %arg2[%c0, %c0_0] : memref<2x128xf32, #tpu.memory_space<vmem>>, vector<2x128xf32>
    %c0_1 = arith.constant 0 : index
    %c0_2 = arith.constant 0 : index
    %1 = vector.load %arg3[%c0_1, %c0_2] : memref<2x128xf32, #tpu.memory_space<vmem>>, vector<2x128xf32>
    %2 = arith.mulf %0, %1 : vector<2x128xf32>
    %cst = arith.constant dense<0.000000e+00> : vector<2xf32>
    %3 = vector.multi_reduction <add>, %2, %cst [1] : vector<2x128xf32> to vector<2xf32>
    %4 = vector.shape_cast %3 : vector<2xf32> to vector<2x1xf32>
    %c0_3 = arith.constant 0 : index
    %c0_4 = arith.constant 0 : index
    %c0_5 = arith.constant 0 : index
    %5 = vector.load %arg4[%c0_3, %c0_4, %c0_5] : memref<1x2x1xf32, #tpu.memory_space<vmem>>, vector<1x2x1xf32>
    %6 = vector.shape_cast %5 : vector<1x2x1xf32> to vector<2x1xf32>
    %7 = vector.shape_cast %4 : vector<2x1xf32> to vector<1x2x1xf32>
    tpu.vector_store %arg4[%c0_3, %c0_4, %c0_5], %7 {strides = array<i32>} : memref<1x2x1xf32, #tpu.memory_space<vmem>>, vector<1x2x1xf32>,
    %cst_6 = arith.constant dense<0.000000e+00> : vector<2xf32>
    %8 = vector.multi_reduction <add>, %0, %cst_6 [1] : vector<2x128xf32> to vector<2xf32>
    %9 = vector.shape_cast %8 : vector<2xf32> to vector<2x1xf32>
    %c0_7 = arith.constant 0 : index
    %c0_8 = arith.constant 0 : index
    %c0_9 = arith.constant 0 : index
    %10 = vector.load %arg5[%c0_7, %c0_8, %c0_9] : memref<1x2x1xf32, #tpu.memory_space<vmem>>, vector<1x2x1xf32>
    %11 = vector.shape_cast %10 : vector<1x2x1xf32> to vector<2x1xf32>
    %12 = vector.shape_cast %9 : vector<2x1xf32> to vector<1x2x1xf32>
    tpu.vector_store %arg5[%c0_7, %c0_8, %c0_9], %12 {strides = array<i32>} : memref<1x2x1xf32, #tpu.memory_space<vmem>>, vector<1x2x1xf32>,
    %cst_10 = arith.constant dense<0.000000e+00> : vector<2xf32>
    %13 = vector.multi_reduction <add>, %1, %cst_10 [1] : vector<2x128xf32> to vector<2xf32>
    %14 = vector.shape_cast %13 : vector<2xf32> to vector<2x1xf32>
    %c0_11 = arith.constant 0 : index
    %c0_12 = arith.constant 0 : index
    %c0_13 = arith.constant 0 : index
    %15 = vector.load %arg6[%c0_11, %c0_12, %c0_13] : memref<1x2x1xf32, #tpu.memory_space<vmem>>, vector<1x2x1xf32>
    %16 = vector.shape_cast %15 : vector<1x2x1xf32> to vector<2x1xf32>
    %17 = vector.shape_cast %14 : vector<2x1xf32> to vector<1x2x1xf32>
    tpu.vector_store %arg6[%c0_11, %c0_12, %c0_13], %17 {strides = array<i32>} : memref<1x2x1xf32, #tpu.memory_space<vmem>>, vector<1x2x1xf32>,
    return
  }
  func.func @transform_0(%arg0: i32, %arg1: i32) -> (i32, i32) {
    %c0_i32 = arith.constant 0 : i32
    return %arg0, %arg1 : i32, i32
  }
  func.func @transform_1(%arg0: i32, %arg1: i32) -> (i32, i32) {
    %c0_i32 = arith.constant 0 : i32
    return %arg0, %arg1 : i32, i32
  }
  func.func @transform_2(%arg0: i32, %arg1: i32) -> (i32, i32, i32) {
    %c0_i32 = arith.constant 0 : i32
    %c0_i32_0 = arith.constant 0 : i32
    return %arg1, %arg0, %c0_i32 : i32, i32, i32
  }
  func.func @transform_3(%arg0: i32, %arg1: i32) -> (i32, i32, i32) {
    %c0_i32 = arith.constant 0 : i32
    %c0_i32_0 = arith.constant 0 : i32
    return %arg1, %arg0, %c0_i32 : i32, i32, i32
  }
  func.func @transform_4(%arg0: i32, %arg1: i32) -> (i32, i32, i32) {
    %c0_i32 = arith.constant 0 : i32
    %c0_i32_0 = arith.constant 0 : i32
    return %arg1, %arg0, %c0_i32 : i32, i32, i32
  }
}

</mosaic_0001>

<llo_original>
// kernel: tpu_custom_call.1
$region0: #{tpu_custom_call.1}
  #allocation0 [shape = 'u32[]', space=smem, size = 0x4, offset = 0x4, fixed_abs, tag = 'smem constant byte address 0x4 - core index']
  #allocation1 [shape = 'u32[144,128]{1,0:T(1,128)}', space=vmem, size = 0x12000, scoped, tag = 'internal scratch']
  %s0 = inlined_call_operand.hbm [shape: f32[2,256], index: 0, kind: input, shape index: {}]
  %s1 = inlined_call_operand.hbm [shape: f32[2,256], index: 1, kind: input, shape index: {}]
  %s2 = inlined_call_operand.vmem [shape: f32[2,2,1], index: 2, kind: output, shape index: {0}]
  %s3 = inlined_call_operand.vmem [shape: f32[2,2,1], index: 3, kind: output, shape index: {1}]
  %s4 = inlined_call_operand.vmem [shape: f32[2,2,1], index: 4, kind: output, shape index: {2}]
  %5 = xla_tuple %s2, %s3, %s4
  %s6 = sld [smem:[#allocation0]]
  $region65: #{tpu_custom_call.1} parent=0
    _
  %s8 = ssub.s32 1, %s6
  %s9 = scalar_select 0, %s8, %s6
  $region1: #{tpu_custom_call.1} parent=0
    #allocation2 [shape = 'u8[2048]{0}', space=vmem, size = 0x800, scoped, tag = 'input window, operand 0']
    #allocation3 [shape = 's32[2]{0}', space=sflag, size = 0x8, scoped, tag = 'scoped memory for tpu_custom_call.1']
    #allocation4 [shape = 'u8[2048]{0}', space=vmem, size = 0x800, scoped, tag = 'input window, operand 1']
    #allocation5 [shape = 's32[2]{0}', space=sflag, size = 0x8, scoped, tag = 'scoped memory for tpu_custom_call.1']
    %10 = vsyncpa [#allocation3], 0
    %s11 = scalar_lea.sflag [#allocation3], 1
    %12 = vsyncpa %s11, 0
    %13 = vsyncpa [#allocation5], 0
    %s14 = scalar_lea.sflag [#allocation5], 1
    %15 = vsyncpa %s14, 0
    loop: start=0, step=1, limit=4
    $region2: #{tpu_custom_call.1} parent=1 // loop_pre_header
      _
    $region3: #{tpu_custom_call.1} parent=1 // loop_header
      %s17 = sphi 0, %s21
      %p18 = scmp.ge.s32.totalorder %s17, 4
      %s24 = sphi 0, %s36
      %s25 = sphi 0, %s32
      %s26 = sphi 0, %s24
      %s27 = sphi 0, %s25
      %s28 = sphi 0, %s26
      %s29 = sphi 0, %s27
      %s41 = sphi 0, %s43
      %s44 = sphi 0, %s41
      %s45 = sphi 0, %s44
      %s61 = sphi 0, %s45
      %s69 = sphi 0, %s71
      %s72 = sphi 0, %s69
      %s73 = sphi 0, %s72
      %s89 = sphi 0, %s73
      %s97 = sphi 0, %s99
      %s100 = sphi 0, %s97
      %s101 = sphi 0, %s100
      %s117 = sphi 0, %s101
      %s125 = sphi 0, %s127
      %s128 = sphi 0, %s125
      %s129 = sphi 0, %s128
      %s145 = sphi 0, %s129
      %s153 = sphi 0, %s155
      %s156 = sphi 0, %s153
      %s157 = sphi 0, %s156
      %s173 = sphi 0, %s157
    $region4: #{tpu_custom_call.1} parent=1 // loop_header_branch
      %20 = sbr.rel (%p18) target = $region8
    $region5: #{tpu_custom_call.1} parent=1 // loop_body
      %s22 = ssub.s32 %s17, 1
      %s23 = ssub.s32 %s17, 2
      %s30 = sadd.s32 1, %s25
      %p31 = scmp.ge.s32.totalorder %s30, 2
      %s32 = scalar_select %p31, 0, %s30
      %s33 = sadd.s32 1, %s24
      %s34 = scalar_select %p31, %s33, %s24
      %p35 = scmp.ge.s32.totalorder %s34, 1
      %s36 = scalar_select %p35, 0, %s34
      %s37 = ssub.s32 %s24, %s36
      %s38 = ssub.s32 %s25, %s32
      %s39 = sor.u32 %s37, %s38
      %p40 = scmp.eq.s32.totalorder %s39, 0
      %s42 = sadd.s32 %s41, 1
      %s43 = scalar_select %p40, %s41, %s42
      %p46 = pneg %p40
      %p47 = scmp.eq.s32.totalorder %s17, 1
      %p48 = por %p46, %p47
      %p49 = scmp.ne.s32.totalorder %s41, %s44
      %p50 = scmp.eq.s32.totalorder %s17, 0
      %p51 = por %p49, %p50
      %p52 = scmp.ne.s32.totalorder %s41, %s44
      %p53 = scmp.eq.s32.totalorder %s22, 1
      %p54 = por %p52, %p53
      %p55 = scmp.ne.s32.totalorder %s44, %s45
      %p56 = scmp.eq.s32.totalorder %s22, 0
      %p57 = por %p55, %p56
      %p58 = scmp.ne.s32.totalorder %s44, %s45
      %p59 = scmp.eq.s32.totalorder %s23, 1
      %p60 = por %p58, %p59
      %p62 = scmp.ne.s32.totalorder %s45, %s61
      %p63 = scmp.eq.s32.totalorder %s23, 0
      %p64 = por %p62, %p63
      %s65 = ssub.s32 %s24, %s36
      %s66 = ssub.s32 %s25, %s32
      %s67 = sor.u32 %s65, %s66
      %p68 = scmp.eq.s32.totalorder %s67, 0
      %s70 = sadd.s32 %s69, 1
      %s71 = scalar_select %p68, %s69, %s70
      %p74 = pneg %p68
      %p75 = scmp.eq.s32.totalorder %s17, 1
      %p76 = por %p74, %p75
      %p77 = scmp.ne.s32.totalorder %s69, %s72
      %p78 = scmp.eq.s32.totalorder %s17, 0
      %p79 = por %p77, %p78
      %p80 = scmp.ne.s32.totalorder %s69, %s72
      %p81 = scmp.eq.s32.totalorder %s22, 1
      %p82 = por %p80, %p81
      %p83 = scmp.ne.s32.totalorder %s72, %s73
      %p84 = scmp.eq.s32.totalorder %s22, 0
      %p85 = por %p83, %p84
      %p86 = scmp.ne.s32.totalorder %s72, %s73
      %p87 = scmp.eq.s32.totalorder %s23, 1
      %p88 = por %p86, %p87
      %p90 = scmp.ne.s32.totalorder %s73, %s89
      %p91 = scmp.eq.s32.totalorder %s23, 0
      %p92 = por %p90, %p91
      %s93 = ssub.s32 %s25, %s32
      %s94 = ssub.s32 %s24, %s36
      %s95 = sor.u32 %s93, %s94
      %p96 = scmp.eq.s32.totalorder %s95, 0
      %s98 = sadd.s32 %s97, 1
      %s99 = scalar_select %p96, %s97, %s98
      %p102 = pneg %p96
      %p103 = scmp.eq.s32.totalorder %s17, 1
      %p104 = por %p102, %p103
      %p105 = scmp.ne.s32.totalorder %s97, %s100
      %p106 = scmp.eq.s32.totalorder %s17, 0
      %p107 = por %p105, %p106
      %p108 = scmp.ne.s32.totalorder %s97, %s100
      %p109 = scmp.eq.s32.totalorder %s22, 1
      %p110 = por %p108, %p109
      %p111 = scmp.ne.s32.totalorder %s100, %s101
      %p112 = scmp.eq.s32.totalorder %s22, 0
      %p113 = por %p111, %p112
      %p114 = scmp.ne.s32.totalorder %s100, %s101
      %p115 = scmp.eq.s32.totalorder %s23, 1
      %p116 = por %p114, %p115
      %p118 = scmp.ne.s32.totalorder %s101, %s117
      %p119 = scmp.eq.s32.totalorder %s23, 0
      %p120 = por %p118, %p119
      %s121 = ssub.s32 %s25, %s32
      %s122 = ssub.s32 %s24, %s36
      %s123 = sor.u32 %s121, %s122
      %p124 = scmp.eq.s32.totalorder %s123, 0
      %s126 = sadd.s32 %s125, 1
      %s127 = scalar_select %p124, %s125, %s126
      %p130 = pneg %p124
      %p131 = scmp.eq.s32.totalorder %s17, 1
      %p132 = por %p130, %p131
      %p133 = scmp.ne.s32.totalorder %s125, %s128
      %p134 = scmp.eq.s32.totalorder %s17, 0
      %p135 = por %p133, %p134
      %p136 = scmp.ne.s32.totalorder %s125, %s128
      %p137 = scmp.eq.s32.totalorder %s22, 1
      %p138 = por %p136, %p137
      %p139 = scmp.ne.s32.totalorder %s128, %s129
      %p140 = scmp.eq.s32.totalorder %s22, 0
      %p141 = por %p139, %p140
      %p142 = scmp.ne.s32.totalorder %s128, %s129
      %p143 = scmp.eq.s32.totalorder %s23, 1
      %p144 = por %p142, %p143
      %p146 = scmp.ne.s32.totalorder %s129, %s145
      %p147 = scmp.eq.s32.totalorder %s23, 0
      %p148 = por %p146, %p147
      %s149 = ssub.s32 %s25, %s32
      %s150 = ssub.s32 %s24, %s36
      %s151 = sor.u32 %s149, %s150
      %p152 = scmp.eq.s32.totalorder %s151, 0
      %s154 = sadd.s32 %s153, 1
      %s155 = scalar_select %p152, %s153, %s154
      %p158 = pneg %p152
      %p159 = scmp.eq.s32.totalorder %s17, 1
      %p160 = por %p158, %p159
      %p161 = scmp.ne.s32.totalorder %s153, %s156
      %p162 = scmp.eq.s32.totalorder %s17, 0
      %p163 = por %p161, %p162
      %p164 = scmp.ne.s32.totalorder %s153, %s156
      %p165 = scmp.eq.s32.totalorder %s22, 1
      %p166 = por %p164, %p165
      %p167 = scmp.ne.s32.totalorder %s156, %s157
      %p168 = scmp.eq.s32.totalorder %s22, 0
      %p169 = por %p167, %p168
      %p170 = scmp.ne.s32.totalorder %s156, %s157
      %p171 = scmp.eq.s32.totalorder %s23, 1
      %p172 = por %p170, %p171
      %p174 = scmp.ne.s32.totalorder %s157, %s173
      %p175 = scmp.eq.s32.totalorder %s23, 0
      %p176 = por %p174, %p175
      %p177 = scmp.le.s32.totalorder 1, %s17
      %p178 = scmp.lt.s32.totalorder %s17, 3
      %p179 = pnand %p177, %p178
      %p180 = pneg %p179
      // Predicated region
      $region9: #{tpu_custom_call.1} parent=5 // pred_check
        _
      $region10: #{tpu_custom_call.1} parent=5 // pred_check_branch
        %182 = sbr.rel (%p179) target = $region12
      $region11: #{tpu_custom_call.1} parent=5 // pred_region
        %s183 = ssub.s32 %s17, 1
      $region12: #{tpu_custom_call.1} parent=5 // pred_fallthru
        _
      %p184 = scmp.lt.s32.totalorder %s17, 2
      // Predicated region
      $region13: #{tpu_custom_call.1} parent=5 // pred_check
        %p185 = pneg %p184
      $region14: #{tpu_custom_call.1} parent=5 // pred_check_branch
        %187 = sbr.rel (%p185) target = $region16
      $region15: #{tpu_custom_call.1} parent=5 // pred_region
        // Predicated region
        $region17: #{tpu_custom_call.1} parent=15 // pred_check
          %p188 = pneg %p51
        $region18: #{tpu_custom_call.1} parent=15 // pred_check_branch
          %190 = sbr.rel (%p188) target = $region20
        $region19: #{tpu_custom_call.1} parent=15 // pred_region
          %s191 = sand.u32 %s41, 1
          %s192 = scalar_lea.sflag [#allocation3], %s191
          %s193 = sand.u32 %s41, 1
          %s194 = smul.addr %s193, 2
          %s195 = scalar_lea.vmem [#allocation2], %s194
          %s197 = ssub.s32 32, 32
          %198 = vsyncadd %s192, %s197
          %s199 = smul.addr %s24, 2
          %s200 = sadd.s32 %s25, %s199
          %s201 = smul.addr %s200, 32
          %s202 = scalar_lea.hbm %s0, %s201
          %s204 = sshll.u32 %s195, 4
          %s205 = int_to_ptr.vmem [resolvable:$true] %s204
          %207 = dma.hbm_to_vmem [thread:$0]  %s202, 32, %s205, %s192
        $region20: #{tpu_custom_call.1} parent=15 // pred_fallthru
          _
        // Predicated region
        $region21: #{tpu_custom_call.1} parent=15 // pred_check
          %p208 = pneg %p79
        $region22: #{tpu_custom_call.1} parent=15 // pred_check_branch
          %210 = sbr.rel (%p208) target = $region24
        $region23: #{tpu_custom_call.1} parent=15 // pred_region
          %s211 = sand.u32 %s69, 1
          %s212 = scalar_lea.sflag [#allocation5], %s211
          %s213 = sand.u32 %s69, 1
          %s214 = smul.addr %s213, 2
          %s215 = scalar_lea.vmem [#allocation4], %s214
          %s217 = ssub.s32 32, 32
          %218 = vsyncadd %s212, %s217
          %s219 = smul.addr %s24, 2
          %s220 = sadd.s32 %s25, %s219
          %s221 = smul.addr %s220, 32
          %s222 = scalar_lea.hbm %s1, %s221
          %s224 = sshll.u32 %s215, 4
          %s225 = int_to_ptr.vmem [resolvable:$true] %s224
          %227 = dma.hbm_to_vmem [thread:$0]  %s222, 32, %s225, %s212
        $region24: #{tpu_custom_call.1} parent=15 // pred_fallthru
          _
      $region16: #{tpu_custom_call.1} parent=5 // pred_fallthru
        _
      %p228 = scmp.le.s32.totalorder 1, %s17
      %p229 = scmp.lt.s32.totalorder %s17, 3
      %p230 = pnand %p228, %p229
      %p231 = pneg %p230
      // Predicated region
      $region25: #{tpu_custom_call.1} parent=5 // pred_check
        _
      $region26: #{tpu_custom_call.1} parent=5 // pred_check_branch
        %233 = sbr.rel (%p230) target = $region28
      $region27: #{tpu_custom_call.1} parent=5 // pred_region
        %s234 = ssub.s32 %s17, 1
        %s235 = sand.u32 %s44, 1
        %s236 = scalar_lea.sflag [#allocation3], %s235
        %s237 = sand.u32 %s44, 1
        %s238 = smul.addr %s237, 2
        %s239 = scalar_lea.vmem [#allocation2], %s238
        // Predicated region
        $region29: #{tpu_custom_call.1} parent=27 // pred_check
          %p240 = pneg %p57
        $region30: #{tpu_custom_call.1} parent=27 // pred_check_branch
          %242 = sbr.rel (%p240) target = $region32
        $region31: #{tpu_custom_call.1} parent=27 // pred_region
          %243 = dma.done %s236, 32
        $region32: #{tpu_custom_call.1} parent=27 // pred_fallthru
          _
        %s244 = sand.u32 %s72, 1
        %s245 = scalar_lea.sflag [#allocation5], %s244
        %s246 = sand.u32 %s72, 1
        %s247 = smul.addr %s246, 2
        %s248 = scalar_lea.vmem [#allocation4], %s247
        // Predicated region
        $region33: #{tpu_custom_call.1} parent=27 // pred_check
          %p249 = pneg %p85
        $region34: #{tpu_custom_call.1} parent=27 // pred_check_branch
          %251 = sbr.rel (%p249) target = $region36
        $region35: #{tpu_custom_call.1} parent=27 // pred_region
          %252 = dma.done %s245, 32
        $region36: #{tpu_custom_call.1} parent=27 // pred_fallthru
          _
        %s253 = sand.u32 %s44, 1
        %s254 = scalar_lea.sflag [#allocation3], %s253
        %s255 = sand.u32 %s44, 1
        %s256 = smul.addr %s255, 2
        %s257 = scalar_lea.vmem [#allocation2], %s256
        %p258 = pneg %p57
        %p259 = pneg %p54
        %s260 = sand.u32 %s72, 1
        %s261 = scalar_lea.sflag [#allocation5], %s260
        %s262 = sand.u32 %s72, 1
        %s263 = smul.addr %s262, 2
        %s264 = scalar_lea.vmem [#allocation4], %s263
        %p265 = pneg %p85
        %p266 = pneg %p82
        %p267 = pneg %p113
        %p268 = pneg %p110
        %p269 = scmp.lt.s32.totalorder %s27, 1
        %s270 = scalar_select %p269, %s27, 1
        %p271 = scmp.lt.s32.totalorder %s26, 0
        %s272 = scalar_select %p271, %s26, 0
        %s273 = sadd.s32 %s272, %s270
        %s274 = smul.addr %s273, 2
        %s275 = scalar_lea.vmem %s2, %s274
        %p276 = pneg %p141
        %p277 = pneg %p138
        %p278 = scmp.lt.s32.totalorder %s27, 1
        %s279 = scalar_select %p278, %s27, 1
        %p280 = scmp.lt.s32.totalorder %s26, 0
        %s281 = scalar_select %p280, %s26, 0
        %s282 = sadd.s32 %s281, %s279
        %s283 = smul.addr %s282, 2
        %s284 = scalar_lea.vmem %s3, %s283
        %p285 = pneg %p169
        %p286 = pneg %p166
        %p287 = scmp.lt.s32.totalorder %s27, 1
        %s288 = scalar_select %p287, %s27, 1
        %p289 = scmp.lt.s32.totalorder %s26, 0
        %s290 = scalar_select %p289, %s26, 0
        %s291 = sadd.s32 %s290, %s288
        %s292 = smul.addr %s291, 2
        %s293 = scalar_lea.vmem %s4, %s292
        %p294 = scmp.lt.s32.totalorder %s27, 1
        %s295 = scalar_select %p294, %s27, 1
        %p296 = scmp.lt.s32.totalorder %s26, 0
        %s297 = scalar_select %p296, %s26, 0
        %s298 = sadd.s32 %s297, %s295
        %s299 = smul.addr %s298, 2
        %s300 = scalar_lea.vmem %s2, %s299
        %p301 = scmp.lt.s32.totalorder %s27, 1
        %s302 = scalar_select %p301, %s27, 1
        %p303 = scmp.lt.s32.totalorder %s26, 0
        %s304 = scalar_select %p303, %s26, 0
        %s305 = sadd.s32 %s304, %s302
        %s306 = smul.addr %s305, 2
        %s307 = scalar_lea.vmem %s3, %s306
        %p308 = scmp.lt.s32.totalorder %s27, 1
        %s309 = scalar_select %p308, %s27, 1
        %p310 = scmp.lt.s32.totalorder %s26, 0
        %s311 = scalar_select %p310, %s26, 0
        %s312 = sadd.s32 %s311, %s309
        %s313 = smul.addr %s312, 2
        %s314 = scalar_lea.vmem %s4, %s313
        %v315 = vld [vmem:[%s239] sm:$0x3]
        %v316 = vld [vmem:[%s248] sm:$0x3]
        %v317 = vmul.f32 %v315, %v316
        %vm318 = vcmask 1041408
        %v319 = vsel %vm318, %v317, 0.0
        %320 = vadd.xlane.f32.xlu0 %v319
        %v321 = vpop.xlane.xlu0 %320
        %vm322 = vcmask 1024
        %323 = vst.msk [vmem:[%s300] sm:$0x3] %vm322, %v321
        %v324 = vsel %vm318, %v315, 0.0
        %325 = vadd.xlane.f32.xlu0 %v324
        %v326 = vpop.xlane.xlu0 %325
        %327 = vst.msk [vmem:[%s307] sm:$0x3] %vm322, %v326
        %v328 = vsel %vm318, %v316, 0.0
        %329 = vadd.xlane.f32.xlu0 %v328
        %v330 = vpop.xlane.xlu0 %329
        %331 = vst.msk [vmem:[%s314] sm:$0x3] %vm322, %v330
        %p332 = scmp.lt.s32.totalorder %s27, 1
        %s333 = scalar_select %p332, %s27, 1
        %p334 = scmp.lt.s32.totalorder %s26, 0
        %s335 = scalar_select %p334, %s26, 0
        %s336 = sadd.s32 %s335, %s333
        %s337 = smul.addr %s336, 2
        %s338 = scalar_lea.vmem %s2, %s337
        %p339 = scmp.lt.s32.totalorder %s27, 1
        %s340 = scalar_select %p339, %s27, 1
        %p341 = scmp.lt.s32.totalorder %s26, 0
        %s342 = scalar_select %p341, %s26, 0
        %s343 = sadd.s32 %s342, %s340
        %s344 = smul.addr %s343, 2
        %s345 = scalar_lea.vmem %s3, %s344
        %p346 = scmp.lt.s32.totalorder %s27, 1
        %s347 = scalar_select %p346, %s27, 1
        %p348 = scmp.lt.s32.totalorder %s26, 0
        %s349 = scalar_select %p348, %s26, 0
        %s350 = sadd.s32 %s349, %s347
        %s351 = smul.addr %s350, 2
        %s352 = scalar_lea.vmem %s4, %s351
        // Predicated region
        $region37: #{tpu_custom_call.1} parent=27 // pred_check
          %p353 = pneg %p110
        $region38: #{tpu_custom_call.1} parent=27 // pred_check_branch
          %355 = sbr.rel (%p353) target = $region40
        $region39: #{tpu_custom_call.1} parent=27 // pred_region
          _
        $region40: #{tpu_custom_call.1} parent=27 // pred_fallthru
          _
        // Predicated region
        $region41: #{tpu_custom_call.1} parent=27 // pred_check
          %p356 = pneg %p138
        $region42: #{tpu_custom_call.1} parent=27 // pred_check_branch
          %358 = sbr.rel (%p356) target = $region44
        $region43: #{tpu_custom_call.1} parent=27 // pred_region
          _
        $region44: #{tpu_custom_call.1} parent=27 // pred_fallthru
          _
        // Predicated region
        $region45: #{tpu_custom_call.1} parent=27 // pred_check
          %p359 = pneg %p166
        $region46: #{tpu_custom_call.1} parent=27 // pred_check_branch
          %361 = sbr.rel (%p359) target = $region48
        $region47: #{tpu_custom_call.1} parent=27 // pred_region
          _
        $region48: #{tpu_custom_call.1} parent=27 // pred_fallthru
          _
      $region28: #{tpu_custom_call.1} parent=5 // pred_fallthru
        _
      %p362 = scmp.le.s32.totalorder 2, %s17
      // Predicated region
      $region49: #{tpu_custom_call.1} parent=5 // pred_check
        %p363 = pneg %p362
      $region50: #{tpu_custom_call.1} parent=5 // pred_check_branch
        %365 = sbr.rel (%p363) target = $region52
      $region51: #{tpu_custom_call.1} parent=5 // pred_region
        %s366 = ssub.s32 %s17, 2
        // Predicated region
        $region53: #{tpu_custom_call.1} parent=51 // pred_check
          %p367 = pneg %p116
        $region54: #{tpu_custom_call.1} parent=51 // pred_check_branch
          %369 = sbr.rel (%p367) target = $region56
        $region55: #{tpu_custom_call.1} parent=51 // pred_region
          %p370 = scmp.lt.s32.totalorder %s29, 1
          %s371 = scalar_select %p370, %s29, 1
          %p372 = scmp.lt.s32.totalorder %s28, 0
          %s373 = scalar_select %p372, %s28, 0
          %s374 = sadd.s32 %s373, %s371
          %s375 = smul.addr %s374, 2
          %s376 = scalar_lea.vmem %s2, %s375
        $region56: #{tpu_custom_call.1} parent=51 // pred_fallthru
          _
        // Predicated region
        $region57: #{tpu_custom_call.1} parent=51 // pred_check
          %p377 = pneg %p144
        $region58: #{tpu_custom_call.1} parent=51 // pred_check_branch
          %379 = sbr.rel (%p377) target = $region60
        $region59: #{tpu_custom_call.1} parent=51 // pred_region
          %p380 = scmp.lt.s32.totalorder %s29, 1
          %s381 = scalar_select %p380, %s29, 1
          %p382 = scmp.lt.s32.totalorder %s28, 0
          %s383 = scalar_select %p382, %s28, 0
          %s384 = sadd.s32 %s383, %s381
          %s385 = smul.addr %s384, 2
          %s386 = scalar_lea.vmem %s3, %s385
        $region60: #{tpu_custom_call.1} parent=51 // pred_fallthru
          _
        // Predicated region
        $region61: #{tpu_custom_call.1} parent=51 // pred_check
          %p387 = pneg %p172
        $region62: #{tpu_custom_call.1} parent=51 // pred_check_branch
          %389 = sbr.rel (%p387) target = $region64
        $region63: #{tpu_custom_call.1} parent=51 // pred_region
          %p390 = scmp.lt.s32.totalorder %s29, 1
          %s391 = scalar_select %p390, %s29, 1
          %p392 = scmp.lt.s32.totalorder %s28, 0
          %s393 = scalar_select %p392, %s28, 0
          %s394 = sadd.s32 %s393, %s391
          %s395 = smul.addr %s394, 2
          %s396 = scalar_lea.vmem %s4, %s395
        $region64: #{tpu_custom_call.1} parent=51 // pred_fallthru
          _
      $region52: #{tpu_custom_call.1} parent=5 // pred_fallthru
        _
    $region6: #{tpu_custom_call.1} parent=1 // loop_footer
      %s21 = sadd.s32 1, %s17
    $region7: #{tpu_custom_call.1} parent=1 // loop_footer_branch
      %16 = sbr.rel target = $region3
    $region8: #{tpu_custom_call.1} parent=1 // loop_exit
      _
    %397 = vsyncpa [#allocation3], 1
    %s398 = scalar_lea.sflag [#allocation3], 1
    %399 = vsyncpa %s398, 1
    %400 = vsyncpa [#allocation5], 1
    %s401 = scalar_lea.sflag [#allocation5], 1
    %402 = vsyncpa %s401, 1

</llo_original>
